<compile_context>
chip_gen: v7x
topology: tpu7x:2x2x1
jax: 0.10.0
libtpu: 0.0.40
codegen_flags: <defaults>
</compile_context>

<pallas_src>
import functools

import jax
import jax.numpy as jnp
from jax.experimental import pallas as pl
from jax.experimental.pallas import tpu as pltpu


def _pow_static_int(x, n: int):
    """x ** n for a static positive integer n via square-and-multiply (VPU only)."""
    assert n >= 1
    result = None
    base = x
    while n > 0:
        if n & 1:
            result = base if result is None else result * base
        n >>= 1
        if n:
            base = base * base
    return result


def _gem_kernel(*refs, eps, inv_s, p_static, needs_s_mask, s_total, block_s):
    # refs = (p_ref?, x_ref, o_ref, acc_ref); p_ref present only for learnable p.
    if p_static is None:
        p_ref, x_ref, o_ref, acc_ref = refs
        p = p_ref[0]                       # SMEM scalar
    else:
        x_ref, o_ref, acc_ref = refs
        p = None

    k = pl.program_id(1)                   # spatial (reduction) axis, "arbitrary"

    @pl.when(k == 0)
    def _init():
        acc_ref[...] = jnp.zeros_like(acc_ref)

    x = x_ref[...].astype(jnp.float32)
    xc = jnp.maximum(x, jnp.float32(eps))

    # x ** p on the hot path.
    if p_static is not None and p_static == int(p_static) and int(p_static) >= 1:
        xp = _pow_static_int(xc, int(p_static))          # VPU multiplies (p=3 default)
    elif p_static is not None:
        xp = jnp.exp(jnp.float32(p_static) * jnp.log(xc))
    else:
        xp = jnp.exp(p * jnp.log(xc))                    # learnable p from SMEM

    if needs_s_mask:
        # Last spatial block may read past S; zero padded lanes before the sum
        # (select, so garbage/NaN in the padded region cannot propagate).
        lane = jax.lax.broadcasted_iota(jnp.int32, xp.shape, 1)
        xp = jnp.where(k * block_s + lane < s_total, xp, jnp.float32(0.0))

    acc_ref[...] += jnp.sum(xp, axis=-1, keepdims=True)  # (block_rows, 1) f32

    @pl.when(k == pl.num_programs(1) - 1)
    def _finalize():
        m = acc_ref[...] * jnp.float32(inv_s)            # mean over H*W
        if p_static is not None:
            y = jnp.exp(jnp.log(m) * jnp.float32(1.0 / p_static))
        else:
            y = jnp.exp(jnp.log(m) / p)                  # m ** (1/p)
        # Lane-dense store: (block_rows, 1) -> (1, 1, block_rows).
        o_ref[...] = jnp.transpose(y)[None].astype(o_ref.dtype)


def gem_pallas(x, p, eps=1e-6, block_rows=None, block_s=None,
               vmem_tile_bytes=4 * 1024 * 1024):
    """GeM pooling. x: (N, C, H, W); p: learnable (1,) array or a static Python scalar."""
    N, C, H, W = x.shape
    R, S = N * C, H * W
    x2 = x.reshape(R, S)
    itemsize = x2.dtype.itemsize

    # ---- spatial (lane) tile: full S unless even 8 rows of it blow the budget ----
    if block_s is None:
        if S <= 128 or S * itemsize * 8 <= vmem_tile_bytes:
            block_s = S
        else:
            block_s = max(128, ((vmem_tile_bytes // (8 * itemsize)) // 128) * 128)
    if block_s >= S:
        block_s = S
    else:
        assert block_s % 128 == 0, "block_s must be a multiple of 128 when tiling S"
    num_s = pl.cdiv(S, block_s)
    needs_s_mask = (S % block_s) != 0

    # ---- row (sublane) tile: as large as the VMEM budget allows ----
    # (For S < 128 the lanes are under-occupied; we simply compensate with more rows.)
    if block_rows is None:
        block_rows = min(max(8, vmem_tile_bytes // (block_s * itemsize)), 2048, max(R, 8))
        if block_rows >= R and R > 8:
            block_rows = pl.cdiv(R, 2)       # keep >= 2 row steps (v7x megacore sharding)
    block_rows = max(8, (block_rows // 8) * 8)
    num_r = pl.cdiv(R, block_rows)           # padded tail rows are sliced away below

    # ---- static vs learnable exponent ----
    if isinstance(p, (int, float)):
        p_static = float(p)
        dyn_args, p_specs = (), ()
    else:
        p_static = None
        p_arr = jnp.asarray(p, dtype=jnp.float32).reshape(-1)
        dyn_args, p_specs = (p_arr,), (pl.BlockSpec(memory_space=pltpu.SMEM),)

    kernel = functools.partial(
        _gem_kernel, eps=float(eps), inv_s=1.0 / float(S), p_static=p_static,
        needs_s_mask=needs_s_mask, s_total=S, block_s=block_s)

    out = pl.pallas_call(
        kernel,
        out_shape=jax.ShapeDtypeStruct((num_r, 1, block_rows), x.dtype),
        grid=(num_r, num_s),
        in_specs=list(p_specs) + [
            pl.BlockSpec((block_rows, block_s), lambda i, k: (i, k)),
        ],
        out_specs=pl.BlockSpec((1, 1, block_rows), lambda i, k: (i, 0, 0)),
        scratch_shapes=[pltpu.VMEM((block_rows, 1), jnp.float32)],
        compiler_params=pltpu.CompilerParams(
            dimension_semantics=("parallel", "arbitrary")),
    )(*dyn_args, x2)

    y = out.reshape(num_r * block_rows)[:R]   # drop padded tail rows
    return y.reshape(N, C, 1, 1)


def gem_ref(x, p, eps=1e-6):
    """Pure-JAX reference matching the PyTorch module (p given as a Python float)."""
    xc = jnp.maximum(x.astype(jnp.float32), jnp.float32(eps))
    m = jnp.mean(xc ** jnp.float32(p), axis=(-2, -1), keepdims=True)
    return (m ** jnp.float32(1.0 / p)).astype(x.dtype)


if __name__ == "__main__":
    eps = 1e-6

    # Test 1: module-default config (learnable p = 3 as a (1,) parameter), auto tiling.
    key = jax.random.PRNGKey(0)
    N, C, H, W = 2, 4, 16, 16
    x = jax.random.normal(key, (N, C, H, W), dtype=jnp.float32)
    p = jnp.ones((1,), dtype=jnp.float32) * 3.0          # nn.Parameter(torch.ones(1)*3)
    y = jax.block_until_ready(gem_pallas(x, p, eps=eps))
    y_ref = gem_ref(x, 3.0, eps=eps)
    assert y.shape == (N, C, 1, 1)
    assert jnp.allclose(y, y_ref, rtol=2e-5, atol=2e-6), (
        f"test1 max err {jnp.max(jnp.abs(y - y_ref))}")

    # Test 2: forced tiling exercises the S-axis accumulator, the partial last
    # spatial block (lane masking), padded tail rows (R % block_rows != 0) and
    # the static-integer-p fast path (p=3 -> x*x*x on the VPU).
    x2 = jax.random.normal(jax.random.PRNGKey(1), (3, 5, 20, 20), dtype=jnp.float32)
    y2 = jax.block_until_ready(gem_pallas(x2, 3, eps=eps, block_rows=8, block_s=128))
    y2_ref = gem_ref(x2, 3.0, eps=eps)
    assert y2.shape == (3, 5, 1, 1)
    assert jnp.allclose(y2, y2_ref, rtol=2e-5, atol=2e-6), (
        f"test2 max err {jnp.max(jnp.abs(y2 - y2_ref))}")

    # Test 3: learnable non-integer p with auto tiling and a ragged row count.
    p3 = jnp.full((1,), 2.2, dtype=jnp.float32)
    y3 = jax.block_until_ready(gem_pallas(x2, p3, eps=eps))
    y3_ref = gem_ref(x2, 2.2, eps=eps)
    assert y3.shape == (3, 5, 1, 1)
    assert jnp.allclose(y3, y3_ref, rtol=2e-5, atol=2e-6), (
        f"test3 max err {jnp.max(jnp.abs(y3 - y3_ref))}")

    print("KERNEL_OK")
</pallas_src>

<mosaic_0001>
module attributes {stable_mosaic.version = 11 : i64} {
  func.func @_gem_kernel(%arg0: i32, %arg1: i32, %arg2: memref<1xf32, #tpu.memory_space<smem>>, %arg3: memref<8x256xf32, #tpu.memory_space<vmem>>, %arg4: memref<1x1x8xf32, #tpu.memory_space<vmem>>, %arg5: memref<8x1xf32, #tpu.memory_space<vmem>>) attributes {dimension_semantics = [#tpu.dimension_semantics<parallel>, #tpu.dimension_semantics<arbitrary>], iteration_bounds = array<i64: 1, 1>, scalar_prefetch = 0 : i64, scratch_operands = 1 : i64, tpu.core_type = #tpu.core_type<tc>, window_params = [{transform_indices = @transform_0, window_bounds = array<i64: 1>}, {transform_indices = @transform_1, window_bounds = array<i64: 8, 256>}, {transform_indices = @transform_2, window_bounds = array<i64: 1, 1, 8>}]} {
    %c0 = arith.constant 0 : index
    %0 = memref.load %arg2[%c0] : memref<1xf32, #tpu.memory_space<smem>>
    %c0_i32 = arith.constant 0 : i32
    %1 = arith.cmpi eq, %arg1, %c0_i32 : i32
    %2 = arith.extui %1 : i1 to i32
    %c0_i32_0 = arith.constant 0 : i32
    %3 = arith.cmpi ne, %2, %c0_i32_0 : i32
    scf.if %3 {
      %cst_10 = arith.constant 0.000000e+00 : f32
      %19 = vector.broadcast %cst_10 : f32 to vector<8x1xf32>
      %c0_11 = arith.constant 0 : index
      %c0_12 = arith.constant 0 : index
      %20 = vector.load %arg5[%c0_11, %c0_12] : memref<8x1xf32, #tpu.memory_space<vmem>>, vector<8x1xf32>
      tpu.vector_store %arg5[%c0_11, %c0_12], %19 {strides = array<i32>} : memref<8x1xf32, #tpu.memory_space<vmem>>, vector<8x1xf32>,
    } else {
    }
    %c0_1 = arith.constant 0 : index
    %c0_2 = arith.constant 0 : index
    %4 = vector.load %arg3[%c0_1, %c0_2] : memref<8x256xf32, #tpu.memory_space<vmem>>, vector<8x256xf32>
    %cst = arith.constant 9.99999997E-7 : f32
    %5 = vector.broadcast %cst : f32 to vector<8x256xf32>
    %6 = arith.maximumf %4, %5 : vector<8x256xf32>
    %7 = math.log %6 : vector<8x256xf32>
    %8 = vector.broadcast %0 : f32 to vector<8x256xf32>
    %9 = arith.mulf %8, %7 : vector<8x256xf32>
    %10 = math.exp %9 : vector<8x256xf32>
    %c0_3 = arith.constant 0 : index
    %c0_4 = arith.constant 0 : index
    %11 = vector.load %arg5[%c0_3, %c0_4] : memref<8x1xf32, #tpu.memory_space<vmem>>, vector<8x1xf32>
    %cst_5 = arith.constant dense<0.000000e+00> : vector<8xf32>
    %12 = vector.multi_reduction <add>, %10, %cst_5 [1] : vector<8x256xf32> to vector<8xf32>
    %13 = vector.shape_cast %12 : vector<8xf32> to vector<8x1xf32>
    %14 = arith.addf %11, %13 : vector<8x1xf32>
    %c0_6 = arith.constant 0 : index
    %c0_7 = arith.constant 0 : index
    %15 = vector.load %arg5[%c0_6, %c0_7] : memref<8x1xf32, #tpu.memory_space<vmem>>, vector<8x1xf32>
    tpu.vector_store %arg5[%c0_6, %c0_7], %14 {strides = array<i32>} : memref<8x1xf32, #tpu.memory_space<vmem>>, vector<8x1xf32>,
    %c0_i32_8 = arith.constant 0 : i32
    %16 = arith.cmpi eq, %arg1, %c0_i32_8 : i32
    %17 = arith.extui %16 : i1 to i32
    %c0_i32_9 = arith.constant 0 : i32
    %18 = arith.cmpi ne, %17, %c0_i32_9 : i32
    scf.if %18 {
      %c0_10 = arith.constant 0 : index
      %c0_11 = arith.constant 0 : index
      %19 = vector.load %arg5[%c0_10, %c0_11] : memref<8x1xf32, #tpu.memory_space<vmem>>, vector<8x1xf32>
      %cst_12 = arith.constant 3.906250e-03 : f32
      %20 = vector.broadcast %cst_12 : f32 to vector<8x1xf32>
      %21 = arith.mulf %19, %20 : vector<8x1xf32>
      %22 = math.log %21 : vector<8x1xf32>
      %23 = vector.broadcast %0 : f32 to vector<8x1xf32>
      %24 = arith.divf %22, %23 : vector<8x1xf32>
      %25 = math.exp %24 : vector<8x1xf32>
      %26 = tpu.transpose %25, [1, 0] : vector<8x1xf32> -> vector<1x8xf32>
      %27 = vector.shape_cast %26 : vector<1x8xf32> to vector<1x1x8xf32>
      %c0_13 = arith.constant 0 : index
      %c0_14 = arith.constant 0 : index
      %c0_15 = arith.constant 0 : index
      %28 = vector.load %arg4[%c0_13, %c0_14, %c0_15] : memref<1x1x8xf32, #tpu.memory_space<vmem>>, vector<1x1x8xf32>
      tpu.vector_store %arg4[%c0_13, %c0_14, %c0_15], %27 {strides = array<i32>} : memref<1x1x8xf32, #tpu.memory_space<vmem>>, vector<1x1x8xf32>,
    } else {
    }
    return
  }
  func.func @transform_0(%arg0: i32, %arg1: i32) -> i32 {
    %c0_i32 = arith.constant 0 : i32
    %c0_i32_0 = arith.constant 0 : i32
    return %c0_i32 : i32
  }
  func.func @transform_1(%arg0: i32, %arg1: i32) -> (i32, i32) {
    %c0_i32 = arith.constant 0 : i32
    return %arg0, %arg1 : i32, i32
  }
  func.func @transform_2(%arg0: i32, %arg1: i32) -> (i32, i32, i32) {
    %c0_i32 = arith.constant 0 : i32
    %c0_i32_0 = arith.constant 0 : i32
    %c0_i32_1 = arith.constant 0 : i32
    return %arg0, %c0_i32, %c0_i32_0 : i32, i32, i32
  }
}

</mosaic_0001>

<llo_original>
// kernel: tpu_custom_call.1
$region0: #{tpu_custom_call.1}
  #allocation0 [shape = 'u32[]', space=smem, size = 0x4, offset = 0x4, fixed_abs, tag = 'smem constant byte address 0x4 - core index']
  #allocation1 [shape = 'u32[144,128]{1,0:T(1,128)}', space=vmem, size = 0x12000, scoped, tag = 'internal scratch']
  #allocation2 [shape = 'f32[8,1]{1,0:T(8,128)}', space=vmem, size = 0x1000, scoped, tag = 'scratch operand']
  #allocation3 [shape = 'f32[1]{0:T(128)S(6)}', space=smem, size = 0x200, scoped, tag = 'scoped memory for tpu_custom_call.1']
  %s0 = inlined_call_operand.<no memory space> [shape: f32[1], index: 0, kind: input, shape index: {}]
  %s1 = inlined_call_operand.hbm [shape: f32[8,256], index: 1, kind: input, shape index: {}]
  %s2 = inlined_call_operand.hbm [shape: f32[1,1,8], index: 2, kind: output, shape index: {}]
  %s3 = sld [smem:[#allocation0]]
  $region30: #{tpu_custom_call.1} parent=0
    _
  %s5 = ssub.s32 1, %s3
  %s6 = scalar_select 0, %s5, %s3
  %7 = sst [smem:[#allocation3]] %s0
  $region1: #{tpu_custom_call.1} parent=0
    #allocation4 [shape = 'u8[8192]{0}', space=vmem, size = 0x2000, scoped, tag = 'input window, operand 1, single buffered']
    #allocation5 [shape = 's32[1]{0}', space=sflag, size = 0x4, scoped, tag = 'scoped memory for tpu_custom_call.1']
    #allocation6 [shape = 's32[1]{0}', space=sflag, size = 0x4, scoped, tag = 'scoped memory for tpu_custom_call.1']
    #allocation7 [shape = 'u8[512]{0}', space=vmem, size = 0x400, scoped, tag = 'output window, operand 0, single buffered']
    %8 = vsyncpa [#allocation5], 0
    %9 = vsyncpa [#allocation6], 0
    // Predicated region
    $region2: #{tpu_custom_call.1} parent=1 // pred_check
      _
    $region3: #{tpu_custom_call.1} parent=1 // pred_check_branch
      %11 = sbr.rel (0) target = $region5
    $region4: #{tpu_custom_call.1} parent=1 // pred_region
      _
    $region5: #{tpu_custom_call.1} parent=1 // pred_fallthru
      _
    // Predicated region
    $region6: #{tpu_custom_call.1} parent=1 // pred_check
      _
    $region7: #{tpu_custom_call.1} parent=1 // pred_check_branch
      %13 = sbr.rel (0) target = $region9
    $region8: #{tpu_custom_call.1} parent=1 // pred_region
      %s15 = ssub.s32 256, 256
      %16 = vsyncadd [#allocation5], %s15
      %s18 = sshll.u32 [#allocation4], 4
      %s19 = int_to_ptr.vmem [resolvable:$true] %s18
      %21 = dma.hbm_to_vmem [thread:$0]  %s1, 256, %s19, [#allocation5]
    $region9: #{tpu_custom_call.1} parent=1 // pred_fallthru
      _
    // Predicated region
    $region10: #{tpu_custom_call.1} parent=1 // pred_check
      _
    $region11: #{tpu_custom_call.1} parent=1 // pred_check_branch
      %23 = sbr.rel (0) target = $region13
    $region12: #{tpu_custom_call.1} parent=1 // pred_region
      %24 = dma.done [#allocation5], 256
    $region13: #{tpu_custom_call.1} parent=1 // pred_fallthru
      _
    %s25 = sld [smem:[#allocation3]]
    %p26 = scmp.eq.s32.totalorder 0, 0
    // Predicated region
    $region14: #{tpu_custom_call.1} parent=1 // pred_check
      %p27 = pneg %p26
    $region15: #{tpu_custom_call.1} parent=1 // pred_check_branch
      %29 = sbr.rel (%p27) target = $region17
    $region16: #{tpu_custom_call.1} parent=1 // pred_region
      %vm30 = vcmask 7168
      %31 = vst.msk [vmem:[#allocation2] sm:$0xff] %vm30, 0.0
    $region17: #{tpu_custom_call.1} parent=1 // pred_fallthru
      _
    %v32 = vld [vmem:[#allocation4] sm:$0xff]
    %v33 = vld [vmem:[#allocation4 + $0x8] sm:$0xff]
    %v34 = vmax.f32 %v32, 1e-06
    %v35 = vmax.f32 %v33, 1e-06
    %v36 = vlog2.pop %v34
    %v37 = vmul.f32 %v36, 0.6931472
    %v38 = vlog2.pop %v35
    %v39 = vmul.f32 %v38, 0.6931472
    %v40 = vstv %s25
    %v41 = vmul.f32 %v40, %v37
    %v42 = vmul.f32 %v40, %v39
    %v43 = vmul.f32 %v41, 1.442695
    %v44 = vpow.pop %v43
    %v45 = vmul.f32 %v42, 1.442695
    %v46 = vpow.pop %v45
    %v47 = vld [vmem:[#allocation2] sm:$0xff]
    %v48 = vadd.f32 %v44, %v46
    %49 = vadd.xlane.f32.xlu0 %v48
    %v50 = vpop.xlane.xlu0 %49
    %v51 = vadd.f32 %v47, %v50
    %vm52 = vcmask 7168
    %53 = vst.msk [vmem:[#allocation2] sm:$0xff] %vm52, %v51
    // Predicated region
    $region18: #{tpu_custom_call.1} parent=1 // pred_check
      %p54 = pneg %p26
    $region19: #{tpu_custom_call.1} parent=1 // pred_check_branch
      %56 = sbr.rel (%p54) target = $region21
    $region20: #{tpu_custom_call.1} parent=1 // pred_region
      %v57 = vld [vmem:[#allocation2] sm:$0xff]
      %v58 = vmul.f32 %v57, 0.00390625
      %v59 = vlog2.pop %v58
      %v60 = vmul.f32 %v59, 0.6931472
      %v61 = vrcp.pop %v40
      %v62 = vmul.f32 %v60, %v61
      %v63 = vmul.f32 %v62, 1.442695
      %v64 = vpow.pop %v63
      %65 = vxpose.xlu0.b32.start [1/16] %v64, 128
      %66 = vxpose.xlu0.b32.cont [2/16] 0.0, 128
      %67 = vxpose.xlu0.b32.cont [3/16] 0.0, 128
      %68 = vxpose.xlu0.b32.cont [4/16] 0.0, 128
      %69 = vxpose.xlu0.b32.cont [5/16] 0.0, 128
      %70 = vxpose.xlu0.b32.cont [6/16] 0.0, 128
      %71 = vxpose.xlu0.b32.cont [7/16] 0.0, 128
      %72 = vxpose.xlu0.b32.cont [8/16] 0.0, 128
      %73 = vxpose.xlu0.b32.cont [9/16] 0.0, 128
      %74 = vxpose.xlu0.b32.cont [10/16] 0.0, 128
      %75 = vxpose.xlu0.b32.cont [11/16] 0.0, 128
      %76 = vxpose.xlu0.b32.cont [12/16] 0.0, 128
      %77 = vxpose.xlu0.b32.cont [13/16] 0.0, 128
      %78 = vxpose.xlu0.b32.cont [14/16] 0.0, 128
      %79 = vxpose.xlu0.b32.cont [15/16] 0.0, 128
      %80 = vxpose.xlu0.b32.end [16/16] 0.0, 128
      %v81 = vpop.trf.xlu0
      %v82 = vpop.trf.xlu0
      %v83 = vpop.trf.xlu0
      %v84 = vpop.trf.xlu0
      %v85 = vpop.trf.xlu0
      %v86 = vpop.trf.xlu0
      %v87 = vpop.trf.xlu0
      %v88 = vpop.trf.xlu0
      %v89 = vpop.trf.xlu0
      %v90 = vpop.trf.xlu0
      %v91 = vpop.trf.xlu0
      %v92 = vpop.trf.xlu0
      %v93 = vpop.trf.xlu0
      %v94 = vpop.trf.xlu0
      %v95 = vpop.trf.xlu0
      %v96 = vpop.trf.xlu0
      %vm97 = vcmask 57344
      %98 = vst.msk [vmem:[#allocation7] sm:$0x1] %vm97, %v81
    $region21: #{tpu_custom_call.1} parent=1 // pred_fallthru
      _
    // Predicated region
    $region22: #{tpu_custom_call.1} parent=1 // pred_check
      _
    $region23: #{tpu_custom_call.1} parent=1 // pred_check_branch
      %100 = sbr.rel (0) target = $region25
    $region24: #{tpu_custom_call.1} parent=1 // pred_region
      %s102 = ssub.s32 16, 16
      %103 = vsyncadd [#allocation6], %s102
      %s105 = sshll.u32 [#allocation7], 4
      %s106 = int_to_ptr.vmem [resolvable:$true] %s105
      %108 = dma.vmem_to_hbm [thread:$0]  %s106, 16, %s2, [#allocation6]
    $region25: #{tpu_custom_call.1} parent=1 // pred_fallthru
      _
    // Predicated region
    $region26: #{tpu_custom_call.1} parent=1 // pred_check
      _
    $region27: #{tpu_custom_call.1} parent=1 // pred_check_branch
      %110 = sbr.rel (0) target = $region29
    $region28: #{tpu_custom_call.1} parent=1 // pred_region
      %111 = dma.done [#allocation6], 16
    $region29: #{tpu_custom_call.1} parent=1 // pred_fallthru
      _
    %112 = vsyncpa [#allocation5], 1
    %113 = vsyncpa [#allocation6], 1

</llo_original>
